<compile_context>
chip_gen: v5e
topology: v5e:2x2
jax: 0.10.0
libtpu: 0.0.40
codegen_flags: <defaults>
</compile_context>

<pallas_src>
import jax
import jax.numpy as jnp
from jax.experimental import pallas as pl
from jax.experimental.pallas import tpu as pltpu


def _make_temporal_crop_kernel(T, periods_per_step):
    """Kernel: copy the time-rolled video into `periods_per_step` periods.

    off_ref : (1,) int32 in SMEM (scalar prefetch) -- offset mod T.
    x_ref   : (T, Fp) lane-dense video block (resident across grid steps).
    o_ref   : (periods_per_step * T, Fp) output block for this grid step.

    out[p*T + t] = x[(t + off) % T]  ==  two contiguous copies per period:
        o[p*T : p*T + (T-off)] = x[off : T]
        o[p*T + (T-off) : (p+1)*T] = x[0 : off]
    The dynamic offset is turned into static slice sizes by enumerating the T
    possible values with pl.when (exactly one branch runs at runtime).
    """

    def kernel(off_ref, x_ref, o_ref):
        off = off_ref[0]
        for k in range(T):

            @pl.when(off == k)
            def _copy(k=k):
                head = T - k
                for p in range(periods_per_step):
                    base = p * T
                    o_ref[base:base + head, :] = x_ref[k:T, :]
                    if k > 0:
                        o_ref[base + head:base + T, :] = x_ref[0:k, :]

    return kernel


def random_temporal_crop(video, key, window_sz=32):
    """Pallas equivalent of Augmentations.random_temporal_crop.

    video: (T, C, H, W) array.  Returns ((window_sz, C, H, W), offset).
    """
    T, C, H, W = video.shape
    F = C * H * W

    # Replicate the numpy doubling loop: length doubles until >= window_sz.
    L = T
    while L < window_sz:
        L *= 2

    # np.random.randint(max(L - window_sz, 1)) -> deterministic jax.random draw.
    max_off = max(L - window_sz, 1)
    offset = jax.random.randint(key, (), 0, max_off, dtype=jnp.int32)
    off_mod = (offset % T).astype(jnp.int32).reshape((1,))

    # Lane-dense flatten; pad the flattened frame dim to a multiple of 128.
    Fp = ((F + 127) // 128) * 128
    x = video.reshape(T, F)
    if Fp != F:
        x = jnp.pad(x, ((0, 0), (0, Fp - F)))

    # One grid step per period of T output frames (each period is identical).
    n_periods = int(pl.cdiv(window_sz, T))
    if T % 8 == 0:
        periods_per_step, grid_n = 1, n_periods          # block rows = T (8-aligned)
    else:
        periods_per_step, grid_n = n_periods, 1          # full-extent output block
    block_rows = periods_per_step * T
    rows_padded = grid_n * block_rows                    # >= window_sz

    kernel = _make_temporal_crop_kernel(T, periods_per_step)

    grid_spec = pltpu.PrefetchScalarGridSpec(
        num_scalar_prefetch=1,                           # off_mod lands in SMEM
        grid=(grid_n,),
        in_specs=[
            # Whole (lane-dense) video block, identical for every grid step ->
            # loaded once and kept resident in VMEM.
            pl.BlockSpec((T, Fp), lambda p, off: (0, 0)),
        ],
        out_specs=pl.BlockSpec((block_rows, Fp), lambda p, off: (p, 0)),
    )

    itemsize = jnp.dtype(video.dtype).itemsize
    needed = 4 * (T * Fp + block_rows * Fp) * itemsize + (1 << 20)
    vmem_limit = int(min(max(needed, 1 << 20), 32 << 20))  # safe on v5e/v6e/v7x

    out = pl.pallas_call(
        kernel,
        out_shape=jax.ShapeDtypeStruct((rows_padded, Fp), video.dtype),
        grid_spec=grid_spec,
        compiler_params=pltpu.CompilerParams(
            dimension_semantics=("parallel",),           # periods are independent
            vmem_limit_bytes=vmem_limit,
        ),
    )(off_mod, x)

    out = out[:window_sz, :F].reshape(window_sz, C, H, W)
    return out, offset


class AugmentationsPallas:
    """Mirror of the PyTorch Augmentations module (no parameters)."""

    def __init__(self, frame_sz=16, window_sz=32):
        self.frame_sz = frame_sz
        self.window_sz = window_sz

    def forward(self, video):
        # TODO(synk): forward() in the source module is a no-op stub (`pass`).
        return None

    def random_temporal_crop_kernel(self, video, key, min_size=None):
        if min_size is None:
            min_size = self.window_sz
        return random_temporal_crop(video, key, window_sz=min_size)


if __name__ == "__main__":
    key = jax.random.PRNGKey(0)
    k_data, k_off = jax.random.split(key)

    # Small shapes consistent with the module: T=8 frames, C=4, spatial 16x16,
    # window_sz=32 (so the video is temporally doubled 8 -> 16 -> 32).
    T, C, H, W = 8, 4, 16, 16
    video = jax.random.normal(k_data, (T, C, H, W), dtype=jnp.float32)

    aug = AugmentationsPallas(frame_sz=H, window_sz=32)
    out, offset = aug.random_temporal_crop_kernel(video, k_off)
    out = jax.block_until_ready(out)

    # Pure-JAX reference of the same semantics (doubling + slice == modular gather).
    ref_idx = (offset + jnp.arange(aug.window_sz)) % T
    ref = jnp.take(video, ref_idx, axis=0)
    assert out.shape == (aug.window_sz, C, H, W)
    assert out.dtype == video.dtype
    assert bool(jnp.all(out == ref))   # pure copy -> exact equality

    print("KERNEL_OK")
</pallas_src>

<mosaic_0001>
module attributes {stable_mosaic.version = 11 : i64} {
  func.func @kernel(%arg0: i32, %arg1: memref<1xi32, #tpu.memory_space<smem>>, %arg2: memref<8x1024xf32, #tpu.memory_space<vmem>>, %arg3: memref<8x1024xf32, #tpu.memory_space<vmem>>) attributes {dimension_semantics = [#tpu.dimension_semantics<parallel>], iteration_bounds = array<i64: 4>, scalar_prefetch = 1 : i64, scratch_operands = 0 : i64, tpu.core_type = #tpu.core_type<tc>, window_params = [{pipeline_mode = #tpu.pipeline_mode<synchronous>, transform_indices = @transform_0, window_bounds = array<i64: 8, 1024>}, {transform_indices = @transform_1, window_bounds = array<i64: 8, 1024>}]} {
    %c0 = arith.constant 0 : index
    %0 = memref.load %arg1[%c0] : memref<1xi32, #tpu.memory_space<smem>>
    %c0_i32 = arith.constant 0 : i32
    %1 = arith.cmpi eq, %0, %c0_i32 : i32
    %2 = arith.extui %1 : i1 to i32
    %c0_i32_0 = arith.constant 0 : i32
    %3 = arith.cmpi ne, %2, %c0_i32_0 : i32
    scf.if %3 {
      %c0_8 = arith.constant 0 : index
      %c0_9 = arith.constant 0 : index
      %25 = vector.load %arg2[%c0_8, %c0_9] : memref<8x1024xf32, #tpu.memory_space<vmem>>, vector<8x1024xf32>
      %c0_10 = arith.constant 0 : index
      %c0_11 = arith.constant 0 : index
      %26 = vector.load %arg3[%c0_10, %c0_11] : memref<8x1024xf32, #tpu.memory_space<vmem>>, vector<8x1024xf32>
      tpu.vector_store %arg3[%c0_10, %c0_11], %25 {strides = array<i32>} : memref<8x1024xf32, #tpu.memory_space<vmem>>, vector<8x1024xf32>,
    } else {
    }
    %c1_i32 = arith.constant 1 : i32
    %4 = arith.cmpi eq, %0, %c1_i32 : i32
    %5 = arith.extui %4 : i1 to i32
    %c0_i32_1 = arith.constant 0 : i32
    %6 = arith.cmpi ne, %5, %c0_i32_1 : i32
    scf.if %6 {
      %c1 = arith.constant 1 : index
      %c0_8 = arith.constant 0 : index
      %25 = vector.load %arg2[%c1, %c0_8] : memref<8x1024xf32, #tpu.memory_space<vmem>>, vector<7x1024xf32>
      %c0_9 = arith.constant 0 : index
      %c0_10 = arith.constant 0 : index
      %26 = vector.load %arg3[%c0_9, %c0_10] : memref<8x1024xf32, #tpu.memory_space<vmem>>, vector<7x1024xf32>
      tpu.vector_store %arg3[%c0_9, %c0_10], %25 {strides = array<i32>} : memref<8x1024xf32, #tpu.memory_space<vmem>>, vector<7x1024xf32>,
      %c0_11 = arith.constant 0 : index
      %c0_12 = arith.constant 0 : index
      %27 = vector.load %arg2[%c0_11, %c0_12] : memref<8x1024xf32, #tpu.memory_space<vmem>>, vector<1x1024xf32>
      %c7 = arith.constant 7 : index
      %c0_13 = arith.constant 0 : index
      %28 = vector.load %arg3[%c7, %c0_13] : memref<8x1024xf32, #tpu.memory_space<vmem>>, vector<1x1024xf32>
      tpu.vector_store %arg3[%c7, %c0_13], %27 {strides = array<i32>} : memref<8x1024xf32, #tpu.memory_space<vmem>>, vector<1x1024xf32>,
    } else {
    }
    %c2_i32 = arith.constant 2 : i32
    %7 = arith.cmpi eq, %0, %c2_i32 : i32
    %8 = arith.extui %7 : i1 to i32
    %c0_i32_2 = arith.constant 0 : i32
    %9 = arith.cmpi ne, %8, %c0_i32_2 : i32
    scf.if %9 {
      %c2 = arith.constant 2 : index
      %c0_8 = arith.constant 0 : index
      %25 = vector.load %arg2[%c2, %c0_8] : memref<8x1024xf32, #tpu.memory_space<vmem>>, vector<6x1024xf32>
      %c0_9 = arith.constant 0 : index
      %c0_10 = arith.constant 0 : index
      %26 = vector.load %arg3[%c0_9, %c0_10] : memref<8x1024xf32, #tpu.memory_space<vmem>>, vector<6x1024xf32>
      tpu.vector_store %arg3[%c0_9, %c0_10], %25 {strides = array<i32>} : memref<8x1024xf32, #tpu.memory_space<vmem>>, vector<6x1024xf32>,
      %c0_11 = arith.constant 0 : index
      %c0_12 = arith.constant 0 : index
      %27 = vector.load %arg2[%c0_11, %c0_12] : memref<8x1024xf32, #tpu.memory_space<vmem>>, vector<2x1024xf32>
      %c6 = arith.constant 6 : index
      %c0_13 = arith.constant 0 : index
      %28 = vector.load %arg3[%c6, %c0_13] : memref<8x1024xf32, #tpu.memory_space<vmem>>, vector<2x1024xf32>
      tpu.vector_store %arg3[%c6, %c0_13], %27 {strides = array<i32>} : memref<8x1024xf32, #tpu.memory_space<vmem>>, vector<2x1024xf32>,
    } else {
    }
    %c3_i32 = arith.constant 3 : i32
    %10 = arith.cmpi eq, %0, %c3_i32 : i32
    %11 = arith.extui %10 : i1 to i32
    %c0_i32_3 = arith.constant 0 : i32
    %12 = arith.cmpi ne, %11, %c0_i32_3 : i32
    scf.if %12 {
      %c3 = arith.constant 3 : index
      %c0_8 = arith.constant 0 : index
      %25 = vector.load %arg2[%c3, %c0_8] : memref<8x1024xf32, #tpu.memory_space<vmem>>, vector<5x1024xf32>
      %c0_9 = arith.constant 0 : index
      %c0_10 = arith.constant 0 : index
      %26 = vector.load %arg3[%c0_9, %c0_10] : memref<8x1024xf32, #tpu.memory_space<vmem>>, vector<5x1024xf32>
      tpu.vector_store %arg3[%c0_9, %c0_10], %25 {strides = array<i32>} : memref<8x1024xf32, #tpu.memory_space<vmem>>, vector<5x1024xf32>,
      %c0_11 = arith.constant 0 : index
      %c0_12 = arith.constant 0 : index
      %27 = vector.load %arg2[%c0_11, %c0_12] : memref<8x1024xf32, #tpu.memory_space<vmem>>, vector<3x1024xf32>
      %c5 = arith.constant 5 : index
      %c0_13 = arith.constant 0 : index
      %28 = vector.load %arg3[%c5, %c0_13] : memref<8x1024xf32, #tpu.memory_space<vmem>>, vector<3x1024xf32>
      tpu.vector_store %arg3[%c5, %c0_13], %27 {strides = array<i32>} : memref<8x1024xf32, #tpu.memory_space<vmem>>, vector<3x1024xf32>,
    } else {
    }
    %c4_i32 = arith.constant 4 : i32
    %13 = arith.cmpi eq, %0, %c4_i32 : i32
    %14 = arith.extui %13 : i1 to i32
    %c0_i32_4 = arith.constant 0 : i32
    %15 = arith.cmpi ne, %14, %c0_i32_4 : i32
    scf.if %15 {
      %c4 = arith.constant 4 : index
      %c0_8 = arith.constant 0 : index
      %25 = vector.load %arg2[%c4, %c0_8] : memref<8x1024xf32, #tpu.memory_space<vmem>>, vector<4x1024xf32>
      %c0_9 = arith.constant 0 : index
      %c0_10 = arith.constant 0 : index
      %26 = vector.load %arg3[%c0_9, %c0_10] : memref<8x1024xf32, #tpu.memory_space<vmem>>, vector<4x1024xf32>
      tpu.vector_store %arg3[%c0_9, %c0_10], %25 {strides = array<i32>} : memref<8x1024xf32, #tpu.memory_space<vmem>>, vector<4x1024xf32>,
      %c0_11 = arith.constant 0 : index
      %c0_12 = arith.constant 0 : index
      %27 = vector.load %arg2[%c0_11, %c0_12] : memref<8x1024xf32, #tpu.memory_space<vmem>>, vector<4x1024xf32>
      %c4_13 = arith.constant 4 : index
      %c0_14 = arith.constant 0 : index
      %28 = vector.load %arg3[%c4_13, %c0_14] : memref<8x1024xf32, #tpu.memory_space<vmem>>, vector<4x1024xf32>
      tpu.vector_store %arg3[%c4_13, %c0_14], %27 {strides = array<i32>} : memref<8x1024xf32, #tpu.memory_space<vmem>>, vector<4x1024xf32>,
    } else {
    }
    %c5_i32 = arith.constant 5 : i32
    %16 = arith.cmpi eq, %0, %c5_i32 : i32
    %17 = arith.extui %16 : i1 to i32
    %c0_i32_5 = arith.constant 0 : i32
    %18 = arith.cmpi ne, %17, %c0_i32_5 : i32
    scf.if %18 {
      %c5 = arith.constant 5 : index
      %c0_8 = arith.constant 0 : index
      %25 = vector.load %arg2[%c5, %c0_8] : memref<8x1024xf32, #tpu.memory_space<vmem>>, vector<3x1024xf32>
      %c0_9 = arith.constant 0 : index
      %c0_10 = arith.constant 0 : index
      %26 = vector.load %arg3[%c0_9, %c0_10] : memref<8x1024xf32, #tpu.memory_space<vmem>>, vector<3x1024xf32>
      tpu.vector_store %arg3[%c0_9, %c0_10], %25 {strides = array<i32>} : memref<8x1024xf32, #tpu.memory_space<vmem>>, vector<3x1024xf32>,
      %c0_11 = arith.constant 0 : index
      %c0_12 = arith.constant 0 : index
      %27 = vector.load %arg2[%c0_11, %c0_12] : memref<8x1024xf32, #tpu.memory_space<vmem>>, vector<5x1024xf32>
      %c3 = arith.constant 3 : index
      %c0_13 = arith.constant 0 : index
      %28 = vector.load %arg3[%c3, %c0_13] : memref<8x1024xf32, #tpu.memory_space<vmem>>, vector<5x1024xf32>
      tpu.vector_store %arg3[%c3, %c0_13], %27 {strides = array<i32>} : memref<8x1024xf32, #tpu.memory_space<vmem>>, vector<5x1024xf32>,
    } else {
    }
    %c6_i32 = arith.constant 6 : i32
    %19 = arith.cmpi eq, %0, %c6_i32 : i32
    %20 = arith.extui %19 : i1 to i32
    %c0_i32_6 = arith.constant 0 : i32
    %21 = arith.cmpi ne, %20, %c0_i32_6 : i32
    scf.if %21 {
      %c6 = arith.constant 6 : index
      %c0_8 = arith.constant 0 : index
      %25 = vector.load %arg2[%c6, %c0_8] : memref<8x1024xf32, #tpu.memory_space<vmem>>, vector<2x1024xf32>
      %c0_9 = arith.constant 0 : index
      %c0_10 = arith.constant 0 : index
      %26 = vector.load %arg3[%c0_9, %c0_10] : memref<8x1024xf32, #tpu.memory_space<vmem>>, vector<2x1024xf32>
      tpu.vector_store %arg3[%c0_9, %c0_10], %25 {strides = array<i32>} : memref<8x1024xf32, #tpu.memory_space<vmem>>, vector<2x1024xf32>,
      %c0_11 = arith.constant 0 : index
      %c0_12 = arith.constant 0 : index
      %27 = vector.load %arg2[%c0_11, %c0_12] : memref<8x1024xf32, #tpu.memory_space<vmem>>, vector<6x1024xf32>
      %c2 = arith.constant 2 : index
      %c0_13 = arith.constant 0 : index
      %28 = vector.load %arg3[%c2, %c0_13] : memref<8x1024xf32, #tpu.memory_space<vmem>>, vector<6x1024xf32>
      tpu.vector_store %arg3[%c2, %c0_13], %27 {strides = array<i32>} : memref<8x1024xf32, #tpu.memory_space<vmem>>, vector<6x1024xf32>,
    } else {
    }
    %c7_i32 = arith.constant 7 : i32
    %22 = arith.cmpi eq, %0, %c7_i32 : i32
    %23 = arith.extui %22 : i1 to i32
    %c0_i32_7 = arith.constant 0 : i32
    %24 = arith.cmpi ne, %23, %c0_i32_7 : i32
    scf.if %24 {
      %c7 = arith.constant 7 : index
      %c0_8 = arith.constant 0 : index
      %25 = vector.load %arg2[%c7, %c0_8] : memref<8x1024xf32, #tpu.memory_space<vmem>>, vector<1x1024xf32>
      %c0_9 = arith.constant 0 : index
      %c0_10 = arith.constant 0 : index
      %26 = vector.load %arg3[%c0_9, %c0_10] : memref<8x1024xf32, #tpu.memory_space<vmem>>, vector<1x1024xf32>
      tpu.vector_store %arg3[%c0_9, %c0_10], %25 {strides = array<i32>} : memref<8x1024xf32, #tpu.memory_space<vmem>>, vector<1x1024xf32>,
      %c0_11 = arith.constant 0 : index
      %c0_12 = arith.constant 0 : index
      %27 = vector.load %arg2[%c0_11, %c0_12] : memref<8x1024xf32, #tpu.memory_space<vmem>>, vector<7x1024xf32>
      %c1 = arith.constant 1 : index
      %c0_13 = arith.constant 0 : index
      %28 = vector.load %arg3[%c1, %c0_13] : memref<8x1024xf32, #tpu.memory_space<vmem>>, vector<7x1024xf32>
      tpu.vector_store %arg3[%c1, %c0_13], %27 {strides = array<i32>} : memref<8x1024xf32, #tpu.memory_space<vmem>>, vector<7x1024xf32>,
    } else {
    }
    return
  }
  func.func @transform_0(%arg0: i32, %arg1: memref<1xi32, #tpu.memory_space<smem>>) -> (i32, i32) {
    %c0_i32 = arith.constant 0 : i32
    %c0_i32_0 = arith.constant 0 : i32
    %c0_i32_1 = arith.constant 0 : i32
    return %c0_i32, %c0_i32_0 : i32, i32
  }
  func.func @transform_1(%arg0: i32, %arg1: memref<1xi32, #tpu.memory_space<smem>>) -> (i32, i32) {
    %c0_i32 = arith.constant 0 : i32
    %c0_i32_0 = arith.constant 0 : i32
    return %arg0, %c0_i32 : i32, i32
  }
}

</mosaic_0001>

<llo_original>
// kernel: tpu_custom_call.1
$region0: #{tpu_custom_call.1}
  #allocation0 [shape = 'u32[]', space=smem, size = 0x4, offset = 0x4, fixed_abs, tag = 'smem constant byte address 0x4 - core index']
  #allocation1 [shape = 'u32[72,128]{1,0:T(1,128)}', space=vmem, size = 0x9000, scoped, tag = 'internal scratch']
  #allocation2 [shape = 's32[1]{0}', space=sflag, size = 0x4, scoped, tag = 'scoped memory for tpu_custom_call.1']
  #allocation3 [shape = 's32[1]{0:T(128)S(6)}', space=smem, size = 0x200, scoped, tag = 'prefetched SMEM operand 0']
  %s0 = inlined_call_operand.<no memory space> [shape: s32[1], index: 0, kind: input, shape index: {}]
  %s1 = inlined_call_operand.hbm [shape: f32[8,1024], index: 1, kind: input, shape index: {}]
  %s2 = inlined_call_operand.hbm [shape: f32[32,1024], index: 2, kind: output, shape index: {}]
  %s3 = sld [smem:[#allocation0]]
  $region73: #{tpu_custom_call.1} parent=0
    _
  %s5 = ssub.s32 1, %s3
  %s6 = scalar_select 0, %s5, %s3
  %7 = sst [smem:[#allocation3]] %s0
  $region1: #{tpu_custom_call.1} parent=0
    #allocation4 [shape = 'u8[32768]{0}', space=vmem, size = 0x8000, scoped, tag = 'input window, operand 1, single buffered']
    #allocation5 [shape = 's32[2]{0}', space=sflag, size = 0x8, scoped, tag = 'scoped memory for tpu_custom_call.1']
    #allocation6 [shape = 's32[2]{0}', space=sflag, size = 0x8, scoped, tag = 'scoped memory for tpu_custom_call.1']
    #allocation7 [shape = 'u8[65536]{0}', space=vmem, size = 0x10000, scoped, tag = 'output window, operand 0']
    %8 = vsyncpa [#allocation5], 0
    %9 = vsyncpa [#allocation6], 0
    %s10 = scalar_lea.sflag [#allocation6], 1
    %11 = vsyncpa %s10, 0
    loop: start=0, step=1, limit=6
    $region2: #{tpu_custom_call.1} parent=1 // loop_pre_header
      _
    $region3: #{tpu_custom_call.1} parent=1 // loop_header
      %s13 = sphi 0, %s17
      %p14 = scmp.ge.s32.totalorder %s13, 6
      %s21 = sphi 0, %s21
      %s23 = sphi 0, %s21
      %s24 = sphi 0, %s23
      %s38 = sphi 0, %s24
      %s44 = sphi 0, %s46
      %s47 = sphi 0, %s44
      %s48 = sphi 0, %s47
      %s64 = sphi 0, %s48
    $region4: #{tpu_custom_call.1} parent=1 // loop_header_branch
      %16 = sbr.rel (%p14) target = $region8
    $region5: #{tpu_custom_call.1} parent=1 // loop_body
      %s18 = ssub.s32 %s13, 1
      %s19 = ssub.s32 %s13, 2
      %s20 = sadd.s32 %s13, 1
      %s22 = sadd.s32 %s21, 1
      %p25 = scmp.eq.s32.totalorder %s13, 3
      %p26 = scmp.ne.s32.totalorder %s21, %s23
      %p27 = scmp.eq.s32.totalorder %s13, 0
      %p28 = por %p26, %p27
      %p29 = scmp.ne.s32.totalorder %s21, %s23
      %p30 = scmp.eq.s32.totalorder %s18, 3
      %p31 = por %p29, %p30
      %p32 = scmp.ne.s32.totalorder %s23, %s24
      %p33 = scmp.eq.s32.totalorder %s18, 0
      %p34 = por %p32, %p33
      %p35 = scmp.ne.s32.totalorder %s23, %s24
      %p36 = scmp.eq.s32.totalorder %s19, 3
      %p37 = por %p35, %p36
      %p39 = scmp.ne.s32.totalorder %s24, %s38
      %p40 = scmp.eq.s32.totalorder %s19, 0
      %p41 = por %p39, %p40
      %s42 = ssub.s32 %s13, %s20
      %p43 = scmp.eq.s32.totalorder %s42, 0
      %s45 = sadd.s32 %s44, 1
      %s46 = scalar_select %p43, %s44, %s45
      %p49 = pneg %p43
      %p50 = scmp.eq.s32.totalorder %s13, 3
      %p51 = por %p49, %p50
      %p52 = scmp.ne.s32.totalorder %s44, %s47
      %p53 = scmp.eq.s32.totalorder %s13, 0
      %p54 = por %p52, %p53
      %p55 = scmp.ne.s32.totalorder %s44, %s47
      %p56 = scmp.eq.s32.totalorder %s18, 3
      %p57 = por %p55, %p56
      %p58 = scmp.ne.s32.totalorder %s47, %s48
      %p59 = scmp.eq.s32.totalorder %s18, 0
      %p60 = por %p58, %p59
      %p61 = scmp.ne.s32.totalorder %s47, %s48
      %p62 = scmp.eq.s32.totalorder %s19, 3
      %p63 = por %p61, %p62
      %p65 = scmp.ne.s32.totalorder %s48, %s64
      %p66 = scmp.eq.s32.totalorder %s19, 0
      %p67 = por %p65, %p66
      %p68 = scmp.le.s32.totalorder 1, %s13
      %p69 = scmp.lt.s32.totalorder %s13, 5
      %p70 = pnand %p68, %p69
      %p71 = pneg %p70
      // Predicated region
      $region9: #{tpu_custom_call.1} parent=5 // pred_check
        _
      $region10: #{tpu_custom_call.1} parent=5 // pred_check_branch
        %73 = sbr.rel (%p70) target = $region12
      $region11: #{tpu_custom_call.1} parent=5 // pred_region
        %s74 = ssub.s32 %s13, 1
        // Predicated region
        $region13: #{tpu_custom_call.1} parent=11 // pred_check
          %p75 = pneg %p34
        $region14: #{tpu_custom_call.1} parent=11 // pred_check_branch
          %77 = sbr.rel (%p75) target = $region16
        $region15: #{tpu_custom_call.1} parent=11 // pred_region
          %79 = vsyncadd [#allocation5], 0
          %s81 = sshll.u32 %s1, 4
          %s82 = int_to_ptr.hbm [resolvable:$true] %s81
          %s83 = sshll.u32 [#allocation4], 4
          %s84 = int_to_ptr.vmem [resolvable:$true] %s83
          %86 = dma.hbm_to_vmem [thread:$0]  %s82, 1024, %s84, [#allocation5]
        $region16: #{tpu_custom_call.1} parent=11 // pred_fallthru
          _
      $region12: #{tpu_custom_call.1} parent=5 // pred_fallthru
        _
      %p87 = scmp.lt.s32.totalorder %s13, 4
      // Predicated region
      $region17: #{tpu_custom_call.1} parent=5 // pred_check
        %p88 = pneg %p87
      $region18: #{tpu_custom_call.1} parent=5 // pred_check_branch
        %90 = sbr.rel (%p88) target = $region20
      $region19: #{tpu_custom_call.1} parent=5 // pred_region
        _
      $region20: #{tpu_custom_call.1} parent=5 // pred_fallthru
        _
      %p91 = scmp.le.s32.totalorder 1, %s13
      %p92 = scmp.lt.s32.totalorder %s13, 5
      %p93 = pnand %p91, %p92
      %p94 = pneg %p93
      // Predicated region
      $region21: #{tpu_custom_call.1} parent=5 // pred_check
        _
      $region22: #{tpu_custom_call.1} parent=5 // pred_check_branch
        %96 = sbr.rel (%p93) target = $region24
      $region23: #{tpu_custom_call.1} parent=5 // pred_region
        %s97 = ssub.s32 %s13, 1
        // Predicated region
        $region25: #{tpu_custom_call.1} parent=23 // pred_check
          %p98 = pneg %p34
        $region26: #{tpu_custom_call.1} parent=23 // pred_check_branch
          %100 = sbr.rel (%p98) target = $region28
        $region27: #{tpu_custom_call.1} parent=23 // pred_region
          %102 = dma.done [#allocation5], 1024
        $region28: #{tpu_custom_call.1} parent=23 // pred_fallthru
          _
        %p103 = pneg %p34
        %p104 = pneg %p31
        %p105 = pneg %p60
        %p106 = pneg %p57
        %s107 = sand.u32 %s47, 1
        %s108 = scalar_lea.sflag [#allocation6], %s107
        %s109 = sand.u32 %s47, 1
        %s110 = smul.addr %s109, 64
        %s111 = scalar_lea.vmem [#allocation7], %s110
        %s112 = sld [smem:[#allocation3]]
        %p113 = scmp.eq.s32.totalorder %s112, 0
        // Predicated region
        $region29: #{tpu_custom_call.1} parent=23 // pred_check
          %p114 = pneg %p113
        $region30: #{tpu_custom_call.1} parent=23 // pred_check_branch
          %116 = sbr.rel (%p114) target = $region32
        $region31: #{tpu_custom_call.1} parent=23 // pred_region
          %v117 = vld [vmem:[#allocation4] sm:$0xff]
          %v118 = vld [vmem:[#allocation4 + $0x8] sm:$0xff]
          %v119 = vld [vmem:[#allocation4 + $0x10] sm:$0xff]
          %v120 = vld [vmem:[#allocation4 + $0x18] sm:$0xff]
          %v121 = vld [vmem:[#allocation4 + $0x20] sm:$0xff]
          %v122 = vld [vmem:[#allocation4 + $0x28] sm:$0xff]
          %v123 = vld [vmem:[#allocation4 + $0x30] sm:$0xff]
          %v124 = vld [vmem:[#allocation4 + $0x38] sm:$0xff]
          %125 = vst [vmem:[%s111] sm:$0xff] %v117
          %126 = vst [vmem:[%s111 + $0x8] sm:$0xff] %v118
          %127 = vst [vmem:[%s111 + $0x10] sm:$0xff] %v119
          %128 = vst [vmem:[%s111 + $0x18] sm:$0xff] %v120
          %129 = vst [vmem:[%s111 + $0x20] sm:$0xff] %v121
          %130 = vst [vmem:[%s111 + $0x28] sm:$0xff] %v122
          %131 = vst [vmem:[%s111 + $0x30] sm:$0xff] %v123
          %132 = vst [vmem:[%s111 + $0x38] sm:$0xff] %v124
        $region32: #{tpu_custom_call.1} parent=23 // pred_fallthru
          _
        %p133 = scmp.eq.s32.totalorder %s112, 1
        // Predicated region
        $region33: #{tpu_custom_call.1} parent=23 // pred_check
          %p134 = pneg %p133
        $region34: #{tpu_custom_call.1} parent=23 // pred_check_branch
          %136 = sbr.rel (%p134) target = $region36
        $region35: #{tpu_custom_call.1} parent=23 // pred_region
          %v137 = vld [vmem:[#allocation4] sm:$0xfe]
          %v138 = vld [vmem:[#allocation4 + $0x8] sm:$0xfe]
          %v139 = vld [vmem:[#allocation4 + $0x10] sm:$0xfe]
          %v140 = vld [vmem:[#allocation4 + $0x18] sm:$0xfe]
          %v141 = vld [vmem:[#allocation4 + $0x20] sm:$0xfe]
          %v142 = vld [vmem:[#allocation4 + $0x28] sm:$0xfe]
          %v143 = vld [vmem:[#allocation4 + $0x30] sm:$0xfe]
          %v144 = vld [vmem:[#allocation4 + $0x38] sm:$0xfe]
          %v153 = vrot.slane %v137, 1
          %v154 = vrot.slane %v138, 1
          %v155 = vrot.slane %v139, 1
          %v156 = vrot.slane %v140, 1
          %v157 = vrot.slane %v141, 1
          %v158 = vrot.slane %v142, 1
          %v159 = vrot.slane %v143, 1
          %v160 = vrot.slane %v144, 1
          %169 = vst [vmem:[%s111] sm:$0x7f] %v153
          %170 = vst [vmem:[%s111 + $0x8] sm:$0x7f] %v154
          %171 = vst [vmem:[%s111 + $0x10] sm:$0x7f] %v155
          %172 = vst [vmem:[%s111 + $0x18] sm:$0x7f] %v156
          %173 = vst [vmem:[%s111 + $0x20] sm:$0x7f] %v157
          %174 = vst [vmem:[%s111 + $0x28] sm:$0x7f] %v158
          %175 = vst [vmem:[%s111 + $0x30] sm:$0x7f] %v159
          %176 = vst [vmem:[%s111 + $0x38] sm:$0x7f] %v160
          %v177 = vld [vmem:[#allocation4] ss:$8 sm:$0xf]
          %v178 = vld [vmem:[#allocation4] ss:$8 sm:$0xf0]
          %v179 = vor.u32 %v177, %v178
          %s180 = scalar_lea.vmem %s111, 7 [#allocation7]
          %181 = vst [vmem:[%s180] ss:$8 sm:$0xf] %v179
          %182 = vst [vmem:[%s180] ss:$8 sm:$0xf0] %v179
        $region36: #{tpu_custom_call.1} parent=23 // pred_fallthru
          _
        %p183 = scmp.eq.s32.totalorder %s112, 2
        // Predicated region
        $region37: #{tpu_custom_call.1} parent=23 // pred_check
          %p184 = pneg %p183
        $region38: #{tpu_custom_call.1} parent=23 // pred_check_branch
          %186 = sbr.rel (%p184) target = $region40
        $region39: #{tpu_custom_call.1} parent=23 // pred_region
          %v187 = vld [vmem:[#allocation4] sm:$0xfc]
          %v188 = vld [vmem:[#allocation4 + $0x8] sm:$0xfc]
          %v189 = vld [vmem:[#allocation4 + $0x10] sm:$0xfc]
          %v190 = vld [vmem:[#allocation4 + $0x18] sm:$0xfc]
          %v191 = vld [vmem:[#allocation4 + $0x20] sm:$0xfc]
          %v192 = vld [vmem:[#allocation4 + $0x28] sm:$0xfc]
          %v193 = vld [vmem:[#allocation4 + $0x30] sm:$0xfc]
          %v194 = vld [vmem:[#allocation4 + $0x38] sm:$0xfc]
          %v203 = vrot.slane %v187, 2
          %v204 = vrot.slane %v188, 2
          %v205 = vrot.slane %v189, 2
          %v206 = vrot.slane %v190, 2
          %v207 = vrot.slane %v191, 2
          %v208 = vrot.slane %v192, 2
          %v209 = vrot.slane %v193, 2
          %v210 = vrot.slane %v194, 2
          %219 = vst [vmem:[%s111] sm:$0x3f] %v203
          %220 = vst [vmem:[%s111 + $0x8] sm:$0x3f] %v204
          %221 = vst [vmem:[%s111 + $0x10] sm:$0x3f] %v205
          %222 = vst [vmem:[%s111 + $0x18] sm:$0x3f] %v206
          %223 = vst [vmem:[%s111 + $0x20] sm:$0x3f] %v207
          %224 = vst [vmem:[%s111 + $0x28] sm:$0x3f] %v208
          %225 = vst [vmem:[%s111 + $0x30] sm:$0x3f] %v209
          %226 = vst [vmem:[%s111 + $0x38] sm:$0x3f] %v210
          %v227 = vld [vmem:[#allocation4] sm:$0x3]
          %v228 = vld [vmem:[#allocation4 + $0x8] sm:$0x3]
          %v229 = vld [vmem:[#allocation4 + $0x10] sm:$0x3]
          %v230 = vld [vmem:[#allocation4 + $0x18] sm:$0x3]
          %v231 = vld [vmem:[#allocation4 + $0x20] sm:$0x3]
          %v232 = vld [vmem:[#allocation4 + $0x28] sm:$0x3]
          %v233 = vld [vmem:[#allocation4 + $0x30] sm:$0x3]
          %v234 = vld [vmem:[#allocation4 + $0x38] sm:$0x3]
          %v243 = vrot.slane %v227, 2
          %v244 = vrot.slane %v228, 2
          %v245 = vrot.slane %v229, 2
          %v246 = vrot.slane %v230, 2
          %v247 = vrot.slane %v231, 2
          %v248 = vrot.slane %v232, 2
          %v249 = vrot.slane %v233, 2
          %v250 = vrot.slane %v234, 2
          %259 = vst [vmem:[%s111] sm:$0xc0] %v243
          %260 = vst [vmem:[%s111 + $0x8] sm:$0xc0] %v244
          %261 = vst [vmem:[%s111 + $0x10] sm:$0xc0] %v245
          %262 = vst [vmem:[%s111 + $0x18] sm:$0xc0] %v246
          %263 = vst [vmem:[%s111 + $0x20] sm:$0xc0] %v247
          %264 = vst [vmem:[%s111 + $0x28] sm:$0xc0] %v248
          %265 = vst [vmem:[%s111 + $0x30] sm:$0xc0] %v249
          %266 = vst [vmem:[%s111 + $0x38] sm:$0xc0] %v250
        $region40: #{tpu_custom_call.1} parent=23 // pred_fallthru
          _
        %p267 = scmp.eq.s32.totalorder %s112, 3
        // Predicated region
        $region41: #{tpu_custom_call.1} parent=23 // pred_check
          %p268 = pneg %p267
        $region42: #{tpu_custom_call.1} parent=23 // pred_check_branch
          %270 = sbr.rel (%p268) target = $region44
        $region43: #{tpu_custom_call.1} parent=23 // pred_region
          %v271 = vld [vmem:[#allocation4] sm:$0xf8]
          %v272 = vld [vmem:[#allocation4 + $0x8] sm:$0xf8]
          %v273 = vld [vmem:[#allocation4 + $0x10] sm:$0xf8]
          %v274 = vld [vmem:[#allocation4 + $0x18] sm:$0xf8]
          %v275 = vld [vmem:[#allocation4 + $0x20] sm:$0xf8]
          %v276 = vld [vmem:[#allocation4 + $0x28] sm:$0xf8]
          %v277 = vld [vmem:[#allocation4 + $0x30] sm:$0xf8]
          %v278 = vld [vmem:[#allocation4 + $0x38] sm:$0xf8]
          %v287 = vrot.slane %v271, 3
          %v288 = vrot.slane %v272, 3
          %v289 = vrot.slane %v273, 3
          %v290 = vrot.slane %v274, 3
          %v291 = vrot.slane %v275, 3
          %v292 = vrot.slane %v276, 3
          %v293 = vrot.slane %v277, 3
          %v294 = vrot.slane %v278, 3
          %303 = vst [vmem:[%s111] sm:$0x1f] %v287
          %304 = vst [vmem:[%s111 + $0x8] sm:$0x1f] %v288
          %305 = vst [vmem:[%s111 + $0x10] sm:$0x1f] %v289
          %306 = vst [vmem:[%s111 + $0x18] sm:$0x1f] %v290
          %307 = vst [vmem:[%s111 + $0x20] sm:$0x1f] %v291
          %308 = vst [vmem:[%s111 + $0x28] sm:$0x1f] %v292
          %309 = vst [vmem:[%s111 + $0x30] sm:$0x1f] %v293
          %310 = vst [vmem:[%s111 + $0x38] sm:$0x1f] %v294
          %v311 = vld [vmem:[#allocation4] sm:$0x7]
          %v312 = vld [vmem:[#allocation4 + $0x8] sm:$0x7]
          %v313 = vld [vmem:[#allocation4 + $0x10] sm:$0x7]
          %v314 = vld [vmem:[#allocation4 + $0x18] sm:$0x7]
          %v315 = vld [vmem:[#allocation4 + $0x20] sm:$0x7]
          %v316 = vld [vmem:[#allocation4 + $0x28] sm:$0x7]
          %v317 = vld [vmem:[#allocation4 + $0x30] sm:$0x7]
          %v318 = vld [vmem:[#allocation4 + $0x38] sm:$0x7]
          %v327 = vrot.slane %v311, 3
          %v328 = vrot.slane %v312, 3
          %v329 = vrot.slane %v313, 3
          %v330 = vrot.slane %v314, 3
          %v331 = vrot.slane %v315, 3
          %v332 = vrot.slane %v316, 3
          %v333 = vrot.slane %v317, 3
          %v334 = vrot.slane %v318, 3
          %343 = vst [vmem:[%s111] sm:$0xe0] %v327
          %344 = vst [vmem:[%s111 + $0x8] sm:$0xe0] %v328
          %345 = vst [vmem:[%s111 + $0x10] sm:$0xe0] %v329
          %346 = vst [vmem:[%s111 + $0x18] sm:$0xe0] %v330
          %347 = vst [vmem:[%s111 + $0x20] sm:$0xe0] %v331
          %348 = vst [vmem:[%s111 + $0x28] sm:$0xe0] %v332
          %349 = vst [vmem:[%s111 + $0x30] sm:$0xe0] %v333
          %350 = vst [vmem:[%s111 + $0x38] sm:$0xe0] %v334
        $region44: #{tpu_custom_call.1} parent=23 // pred_fallthru
          _
        %p351 = scmp.eq.s32.totalorder %s112, 4
        // Predicated region
        $region45: #{tpu_custom_call.1} parent=23 // pred_check
          %p352 = pneg %p351
        $region46: #{tpu_custom_call.1} parent=23 // pred_check_branch
          %354 = sbr.rel (%p352) target = $region48
        $region47: #{tpu_custom_call.1} parent=23 // pred_region
          %v355 = vld [vmem:[#allocation4] sm:$0xf0]
          %v356 = vld [vmem:[#allocation4 + $0x8] sm:$0xf0]
          %v357 = vld [vmem:[#allocation4 + $0x10] sm:$0xf0]
          %v358 = vld [vmem:[#allocation4 + $0x18] sm:$0xf0]
          %v359 = vld [vmem:[#allocation4 + $0x20] sm:$0xf0]
          %v360 = vld [vmem:[#allocation4 + $0x28] sm:$0xf0]
          %v361 = vld [vmem:[#allocation4 + $0x30] sm:$0xf0]
          %v362 = vld [vmem:[#allocation4 + $0x38] sm:$0xf0]
          %v371 = vrot.slane %v355, 4
          %v372 = vrot.slane %v356, 4
          %v373 = vrot.slane %v357, 4
          %v374 = vrot.slane %v358, 4
          %v375 = vrot.slane %v359, 4
          %v376 = vrot.slane %v360, 4
          %v377 = vrot.slane %v361, 4
          %v378 = vrot.slane %v362, 4
          %387 = vst [vmem:[%s111] sm:$0xf] %v371
          %388 = vst [vmem:[%s111 + $0x8] sm:$0xf] %v372
          %389 = vst [vmem:[%s111 + $0x10] sm:$0xf] %v373
          %390 = vst [vmem:[%s111 + $0x18] sm:$0xf] %v374
          %391 = vst [vmem:[%s111 + $0x20] sm:$0xf] %v375
          %392 = vst [vmem:[%s111 + $0x28] sm:$0xf] %v376
          %393 = vst [vmem:[%s111 + $0x30] sm:$0xf] %v377
          %394 = vst [vmem:[%s111 + $0x38] sm:$0xf] %v378
          %v395 = vld [vmem:[#allocation4] sm:$0xf]
          %v396 = vld [vmem:[#allocation4 + $0x8] sm:$0xf]
          %v397 = vld [vmem:[#allocation4 + $0x10] sm:$0xf]
          %v398 = vld [vmem:[#allocation4 + $0x18] sm:$0xf]
          %v399 = vld [vmem:[#allocation4 + $0x20] sm:$0xf]
          %v400 = vld [vmem:[#allocation4 + $0x28] sm:$0xf]
          %v401 = vld [vmem:[#allocation4 + $0x30] sm:$0xf]
          %v402 = vld [vmem:[#allocation4 + $0x38] sm:$0xf]
          %v411 = vrot.slane %v395, 4
          %v412 = vrot.slane %v396, 4
          %v413 = vrot.slane %v397, 4
          %v414 = vrot.slane %v398, 4
          %v415 = vrot.slane %v399, 4
          %v416 = vrot.slane %v400, 4
          %v417 = vrot.slane %v401, 4
          %v418 = vrot.slane %v402, 4
          %427 = vst [vmem:[%s111] sm:$0xf0] %v411
          %428 = vst [vmem:[%s111 + $0x8] sm:$0xf0] %v412
          %429 = vst [vmem:[%s111 + $0x10] sm:$0xf0] %v413
          %430 = vst [vmem:[%s111 + $0x18] sm:$0xf0] %v414
          %431 = vst [vmem:[%s111 + $0x20] sm:$0xf0] %v415
          %432 = vst [vmem:[%s111 + $0x28] sm:$0xf0] %v416
          %433 = vst [vmem:[%s111 + $0x30] sm:$0xf0] %v417
          %434 = vst [vmem:[%s111 + $0x38] sm:$0xf0] %v418
        $region48: #{tpu_custom_call.1} parent=23 // pred_fallthru
          _
        %p435 = scmp.eq.s32.totalorder %s112, 5
        // Predicated region
        $region49: #{tpu_custom_call.1} parent=23 // pred_check
          %p436 = pneg %p435
        $region50: #{tpu_custom_call.1} parent=23 // pred_check_branch
          %438 = sbr.rel (%p436) target = $region52
        $region51: #{tpu_custom_call.1} parent=23 // pred_region
          %v439 = vld [vmem:[#allocation4] sm:$0xe0]
          %v440 = vld [vmem:[#allocation4 + $0x8] sm:$0xe0]
          %v441 = vld [vmem:[#allocation4 + $0x10] sm:$0xe0]
          %v442 = vld [vmem:[#allocation4 + $0x18] sm:$0xe0]
          %v443 = vld [vmem:[#allocation4 + $0x20] sm:$0xe0]
          %v444 = vld [vmem:[#allocation4 + $0x28] sm:$0xe0]
          %v445 = vld [vmem:[#allocation4 + $0x30] sm:$0xe0]
          %v446 = vld [vmem:[#allocation4 + $0x38] sm:$0xe0]
          %v455 = vrot.slane %v439, 5
          %v456 = vrot.slane %v440, 5
          %v457 = vrot.slane %v441, 5
          %v458 = vrot.slane %v442, 5
          %v459 = vrot.slane %v443, 5
          %v460 = vrot.slane %v444, 5
          %v461 = vrot.slane %v445, 5
          %v462 = vrot.slane %v446, 5
          %471 = vst [vmem:[%s111] sm:$0x7] %v455
          %472 = vst [vmem:[%s111 + $0x8] sm:$0x7] %v456
          %473 = vst [vmem:[%s111 + $0x10] sm:$0x7] %v457
          %474 = vst [vmem:[%s111 + $0x18] sm:$0x7] %v458
          %475 = vst [vmem:[%s111 + $0x20] sm:$0x7] %v459
          %476 = vst [vmem:[%s111 + $0x28] sm:$0x7] %v460
          %477 = vst [vmem:[%s111 + $0x30] sm:$0x7] %v461
          %478 = vst [vmem:[%s111 + $0x38] sm:$0x7] %v462
          %v479 = vld [vmem:[#allocation4] sm:$0x1f]
          %v480 = vld [vmem:[#allocation4 + $0x8] sm:$0x1f]
          %v481 = vld [vmem:[#allocation4 + $0x10] sm:$0x1f]
          %v482 = vld [vmem:[#allocation4 + $0x18] sm:$0x1f]
          %v483 = vld [vmem:[#allocation4 + $0x20] sm:$0x1f]
          %v484 = vld [vmem:[#allocation4 + $0x28] sm:$0x1f]
          %v485 = vld [vmem:[#allocation4 + $0x30] sm:$0x1f]
          %v486 = vld [vmem:[#allocation4 + $0x38] sm:$0x1f]
          %v495 = vrot.slane %v479, 5
          %v496 = vrot.slane %v480, 5
          %v497 = vrot.slane %v481, 5
          %v498 = vrot.slane %v482, 5
          %v499 = vrot.slane %v483, 5
          %v500 = vrot.slane %v484, 5
          %v501 = vrot.slane %v485, 5
          %v502 = vrot.slane %v486, 5
          %511 = vst [vmem:[%s111] sm:$0xf8] %v495
          %512 = vst [vmem:[%s111 + $0x8] sm:$0xf8] %v496
          %513 = vst [vmem:[%s111 + $0x10] sm:$0xf8] %v497
          %514 = vst [vmem:[%s111 + $0x18] sm:$0xf8] %v498
          %515 = vst [vmem:[%s111 + $0x20] sm:$0xf8] %v499
          %516 = vst [vmem:[%s111 + $0x28] sm:$0xf8] %v500
          %517 = vst [vmem:[%s111 + $0x30] sm:$0xf8] %v501
          %518 = vst [vmem:[%s111 + $0x38] sm:$0xf8] %v502
        $region52: #{tpu_custom_call.1} parent=23 // pred_fallthru
          _
        %p519 = scmp.eq.s32.totalorder %s112, 6
        // Predicated region
        $region53: #{tpu_custom_call.1} parent=23 // pred_check
          %p520 = pneg %p519
        $region54: #{tpu_custom_call.1} parent=23 // pred_check_branch
          %522 = sbr.rel (%p520) target = $region56
        $region55: #{tpu_custom_call.1} parent=23 // pred_region
          %v523 = vld [vmem:[#allocation4] sm:$0xc0]
          %v524 = vld [vmem:[#allocation4 + $0x8] sm:$0xc0]
          %v525 = vld [vmem:[#allocation4 + $0x10] sm:$0xc0]
          %v526 = vld [vmem:[#allocation4 + $0x18] sm:$0xc0]
          %v527 = vld [vmem:[#allocation4 + $0x20] sm:$0xc0]
          %v528 = vld [vmem:[#allocation4 + $0x28] sm:$0xc0]
          %v529 = vld [vmem:[#allocation4 + $0x30] sm:$0xc0]
          %v530 = vld [vmem:[#allocation4 + $0x38] sm:$0xc0]
          %v539 = vrot.slane %v523, 6
          %v540 = vrot.slane %v524, 6
          %v541 = vrot.slane %v525, 6
          %v542 = vrot.slane %v526, 6
          %v543 = vrot.slane %v527, 6
          %v544 = vrot.slane %v528, 6
          %v545 = vrot.slane %v529, 6
          %v546 = vrot.slane %v530, 6
          %555 = vst [vmem:[%s111] sm:$0x3] %v539
          %556 = vst [vmem:[%s111 + $0x8] sm:$0x3] %v540
          %557 = vst [vmem:[%s111 + $0x10] sm:$0x3] %v541
          %558 = vst [vmem:[%s111 + $0x18] sm:$0x3] %v542
          %559 = vst [vmem:[%s111 + $0x20] sm:$0x3] %v543
          %560 = vst [vmem:[%s111 + $0x28] sm:$0x3] %v544
          %561 = vst [vmem:[%s111 + $0x30] sm:$0x3] %v545
          %562 = vst [vmem:[%s111 + $0x38] sm:$0x3] %v546
          %v563 = vld [vmem:[#allocation4] sm:$0x3f]
          %v564 = vld [vmem:[#allocation4 + $0x8] sm:$0x3f]
          %v565 = vld [vmem:[#allocation4 + $0x10] sm:$0x3f]
          %v566 = vld [vmem:[#allocation4 + $0x18] sm:$0x3f]
          %v567 = vld [vmem:[#allocation4 + $0x20] sm:$0x3f]
          %v568 = vld [vmem:[#allocation4 + $0x28] sm:$0x3f]
          %v569 = vld [vmem:[#allocation4 + $0x30] sm:$0x3f]
          %v570 = vld [vmem:[#allocation4 + $0x38] sm:$0x3f]
          %v579 = vrot.slane %v563, 6
          %v580 = vrot.slane %v564, 6
          %v581 = vrot.slane %v565, 6
          %v582 = vrot.slane %v566, 6
          %v583 = vrot.slane %v567, 6
          %v584 = vrot.slane %v568, 6
          %v585 = vrot.slane %v569, 6
          %v586 = vrot.slane %v570, 6
          %595 = vst [vmem:[%s111] sm:$0xfc] %v579
          %596 = vst [vmem:[%s111 + $0x8] sm:$0xfc] %v580
          %597 = vst [vmem:[%s111 + $0x10] sm:$0xfc] %v581
          %598 = vst [vmem:[%s111 + $0x18] sm:$0xfc] %v582
          %599 = vst [vmem:[%s111 + $0x20] sm:$0xfc] %v583
          %600 = vst [vmem:[%s111 + $0x28] sm:$0xfc] %v584
          %601 = vst [vmem:[%s111 + $0x30] sm:$0xfc] %v585
          %602 = vst [vmem:[%s111 + $0x38] sm:$0xfc] %v586
        $region56: #{tpu_custom_call.1} parent=23 // pred_fallthru
          _
        %p603 = scmp.eq.s32.totalorder %s112, 7
        // Predicated region
        $region57: #{tpu_custom_call.1} parent=23 // pred_check
          %p604 = pneg %p603
        $region58: #{tpu_custom_call.1} parent=23 // pred_check_branch
          %606 = sbr.rel (%p604) target = $region60
        $region59: #{tpu_custom_call.1} parent=23 // pred_region
          %s607 = scalar_lea.vmem [#allocation4], 7
          %v608 = vld [vmem:[%s607] ss:$8 sm:$0xf]
          %v609 = vld [vmem:[%s607] ss:$8 sm:$0xf0]
          %v610 = vor.u32 %v608, %v609
          %611 = vst [vmem:[%s111] ss:$8 sm:$0xf] %v610
          %612 = vst [vmem:[%s111] ss:$8 sm:$0xf0] %v610
          %v613 = vld [vmem:[#allocation4] sm:$0x7f]
          %v614 = vld [vmem:[#allocation4 + $0x8] sm:$0x7f]
          %v615 = vld [vmem:[#allocation4 + $0x10] sm:$0x7f]
          %v616 = vld [vmem:[#allocation4 + $0x18] sm:$0x7f]
          %v617 = vld [vmem:[#allocation4 + $0x20] sm:$0x7f]
          %v618 = vld [vmem:[#allocation4 + $0x28] sm:$0x7f]
          %v619 = vld [vmem:[#allocation4 + $0x30] sm:$0x7f]
          %v620 = vld [vmem:[#allocation4 + $0x38] sm:$0x7f]
          %v629 = vrot.slane %v613, 7
          %v630 = vrot.slane %v614, 7
          %v631 = vrot.slane %v615, 7
          %v632 = vrot.slane %v616, 7
          %v633 = vrot.slane %v617, 7
          %v634 = vrot.slane %v618, 7
          %v635 = vrot.slane %v619, 7
          %v636 = vrot.slane %v620, 7
          %645 = vst [vmem:[%s111] sm:$0xfe] %v629
          %646 = vst [vmem:[%s111 + $0x8] sm:$0xfe] %v630
          %647 = vst [vmem:[%s111 + $0x10] sm:$0xfe] %v631
          %648 = vst [vmem:[%s111 + $0x18] sm:$0xfe] %v632
          %649 = vst [vmem:[%s111 + $0x20] sm:$0xfe] %v633
          %650 = vst [vmem:[%s111 + $0x28] sm:$0xfe] %v634
          %651 = vst [vmem:[%s111 + $0x30] sm:$0xfe] %v635
          %652 = vst [vmem:[%s111 + $0x38] sm:$0xfe] %v636
        $region60: #{tpu_custom_call.1} parent=23 // pred_fallthru
          _
        %s653 = sand.u32 %s47, 1
        %s654 = scalar_lea.sflag [#allocation6], %s653
        %s655 = sand.u32 %s47, 1
        %s656 = smul.addr %s655, 64
        %s657 = scalar_lea.vmem [#allocation7], %s656
        // Predicated region
        $region61: #{tpu_custom_call.1} parent=23 // pred_check
          %p658 = pneg %p57
        $region62: #{tpu_custom_call.1} parent=23 // pred_check_branch
          %660 = sbr.rel (%p658) target = $region64
        $region63: #{tpu_custom_call.1} parent=23 // pred_region
          %662 = vsyncadd %s654, 0
          %s663 = smul.addr %s18, 8
          %s664 = smul.addr %s663, 8
          %s665 = scalar_lea.hbm %s2, %s664
          %s667 = sshll.u32 %s657, 4
          %s668 = int_to_ptr.vmem [resolvable:$true] %s667
          %s669 = sshll.u32 %s665, 4
          %s670 = int_to_ptr.hbm [resolvable:$true] %s669
          %672 = dma.vmem_to_hbm [thread:$0]  %s668, 1024, %s670, %s654
        $region64: #{tpu_custom_call.1} parent=23 // pred_fallthru
          _
      $region24: #{tpu_custom_call.1} parent=5 // pred_fallthru
        _
      %p673 = scmp.le.s32.totalorder 2, %s13
      // Predicated region
      $region65: #{tpu_custom_call.1} parent=5 // pred_check
        %p674 = pneg %p673
      $region66: #{tpu_custom_call.1} parent=5 // pred_check_branch
        %676 = sbr.rel (%p674) target = $region68
      $region67: #{tpu_custom_call.1} parent=5 // pred_region
        %s677 = ssub.s32 %s13, 2
        // Predicated region
        $region69: #{tpu_custom_call.1} parent=67 // pred_check
          %p678 = pneg %p63
        $region70: #{tpu_custom_call.1} parent=67 // pred_check_branch
          %680 = sbr.rel (%p678) target = $region72
        $region71: #{tpu_custom_call.1} parent=67 // pred_region
          %s681 = sand.u32 %s48, 1
          %s682 = scalar_lea.sflag [#allocation6], %s681
          %s683 = sand.u32 %s48, 1
          %s684 = smul.addr %s683, 64
          %s685 = scalar_lea.vmem [#allocation7], %s684
          %687 = dma.done %s682, 1024
        $region72: #{tpu_custom_call.1} parent=67 // pred_fallthru
          _
      $region68: #{tpu_custom_call.1} parent=5 // pred_fallthru
        _
    $region6: #{tpu_custom_call.1} parent=1 // loop_footer
      %s17 = sadd.s32 1, %s13
    $region7: #{tpu_custom_call.1} parent=1 // loop_footer_branch
      %12 = sbr.rel target = $region3
    $region8: #{tpu_custom_call.1} parent=1 // loop_exit
      _
    %688 = vsyncpa [#allocation5], 1
    %s689 = scalar_lea.sflag [#allocation5], 1
    %690 = vsyncpa %s689, 1
    %691 = vsyncpa [#allocation6], 1
    %s692 = scalar_lea.sflag [#allocation6], 1
    %693 = vsyncpa %s692, 1

</llo_original>
